<compile_context>
chip_gen: v7x
topology: tpu7x:2x2x1
jax: 0.10.0
libtpu: 0.0.40
codegen_flags: <defaults>
</compile_context>

<pallas_src>
import jax
import jax.numpy as jnp
from jax import lax
from jax.experimental import pallas as pl
from jax.experimental.pallas import tpu as pltpu

HIDDEN = 128
_TB_CAP = 4096  # cross-generation batch-tile cap (review: 2048-4096 all gens)


def _softq_kernel(x_ref, w1_ref, b1_ref, w2_ref, b2_ref, w3_ref, b3_ref, o_ref):
    # Layer 1: fused [TB, D] bf16 @ [D, H] bf16 -> f32 accumulate, bias + ReLU.
    h1 = (jnp.dot(x_ref[...], w1_ref[...], preferred_element_type=jnp.float32)
          + b1_ref[...])
    h1 = jnp.maximum(h1, 0.0).astype(jnp.bfloat16)

    # Layer 2: bf16 matmul, f32 accumulate, bias + ReLU in f32.
    h2 = jnp.dot(h1, w2_ref[...], preferred_element_type=jnp.float32) + b2_ref[...]
    h2 = jnp.maximum(h2, 0.0)

    # Layer 3: contract the hidden axis of h2 [TB, H] against the w3 row [1, H],
    # producing a lane-dense [1, TB] result row (unmasked stores, dense writeback).
    q_row = lax.dot_general(
        w3_ref[...], h2,
        dimension_numbers=(((1,), (1,)), ((), ())),
        preferred_element_type=jnp.float32) + b3_ref[0, 0]
    o_ref[...] = q_row[None].astype(o_ref.dtype)   # (1, 1, TB)


def _round_up(x, m):
    return ((x + m - 1) // m) * m


def _choose_tiling(B, cap=_TB_CAP):
    """Pick (TB, B_pad, num_tiles): TB multiple of 8, pad waste <= num_tiles*8+7."""
    b8 = _round_up(B, 8)
    num_tiles = max(1, -(-b8 // cap))
    # Keep >= 2 grid steps for larger batches so the "parallel" batch axis can
    # actually shard across both TensorCores on v7x.
    if num_tiles == 1 and b8 >= 1024:
        num_tiles = 2
    tb = _round_up(-(-b8 // num_tiles), 8)
    return tb, tb * num_tiles, num_tiles


def prepare_params(params):
    """One-time weight prep (bf16 casts / reshapes) kept off the per-call path."""
    w1, b1, w2, b2, w3, b3 = params
    return (
        jnp.asarray(w1, jnp.bfloat16),                        # [D, H]
        jnp.asarray(b1, jnp.float32).reshape(1, HIDDEN),      # [1, H]
        jnp.asarray(w2, jnp.bfloat16),                        # [H, H]
        jnp.asarray(b2, jnp.float32).reshape(1, HIDDEN),      # [1, H]
        jnp.asarray(w3, jnp.float32).reshape(1, HIDDEN),      # [H, 1] -> [1, H]
        jnp.asarray(b3, jnp.float32).reshape(1, 1),           # SMEM scalar
    )


def softq_forward(state, action, prepared):
    """state: [B, state_dim], action: [B, action_dim] -> q: [B, 1]."""
    w1, b1, w2, b2, w3_row, b3 = prepared
    B = state.shape[0]
    D = state.shape[1] + action.shape[1]

    # Fused, bf16 input stream (single streamed ref, half the HBM read traffic).
    x = jnp.concatenate(
        [state.astype(jnp.bfloat16), action.astype(jnp.bfloat16)], axis=1)

    TB, B_pad, num_tiles = _choose_tiling(B)
    if B_pad != B:
        x = jnp.pad(x, ((0, B_pad - B), (0, 0)))

    resident = lambda shape: pl.BlockSpec(shape, lambda i: (0, 0))

    q_rows = pl.pallas_call(
        _softq_kernel,
        out_shape=jax.ShapeDtypeStruct((num_tiles, 1, TB), jnp.float32),
        grid=(num_tiles,),
        in_specs=[
            pl.BlockSpec((TB, D), lambda i: (i, 0)),            # streamed x (bf16)
            resident((D, HIDDEN)),                              # w1 (bf16)
            resident((1, HIDDEN)),                              # b1
            resident((HIDDEN, HIDDEN)),                         # w2 (bf16)
            resident((1, HIDDEN)),                              # b2
            resident((1, HIDDEN)),                              # w3 row
            pl.BlockSpec(memory_space=pltpu.MemorySpace.SMEM),  # b3 scalar
        ],
        out_specs=pl.BlockSpec((1, 1, TB), lambda i: (i, 0, 0)),
        compiler_params=pltpu.CompilerParams(
            dimension_semantics=("parallel",),
            vmem_limit_bytes=32 * 1024 * 1024),
    )(x, w1, b1, w2, b2, w3_row, b3)

    return q_rows.reshape(B_pad, 1)[:B]


softq_forward_jit = jax.jit(softq_forward)


def init_params(key, state_dim, action_dim, edge=0.003):
    """Deterministic synthetic init mirroring nn.Linear defaults + edge init."""
    d_in = state_dim + action_dim
    k = jax.random.split(key, 6)

    def lin_init(kw, kb, fan_in, fan_out):
        bound = 1.0 / jnp.sqrt(fan_in)
        w = jax.random.uniform(kw, (fan_in, fan_out), jnp.float32, -bound, bound)
        b = jax.random.uniform(kb, (1, fan_out), jnp.float32, -bound, bound)
        return w, b

    w1, b1 = lin_init(k[0], k[1], d_in, HIDDEN)
    w2, b2 = lin_init(k[2], k[3], HIDDEN, HIDDEN)
    # linear3: uniform_(-edge, edge)
    w3 = jax.random.uniform(k[4], (HIDDEN, 1), jnp.float32, -edge, edge)
    b3 = jax.random.uniform(k[5], (1, 1), jnp.float32, -edge, edge)
    return (w1, b1, w2, b2, w3, b3)


def softq_reference(state, action, params):
    w1, b1, w2, b2, w3, b3 = params
    x = jnp.concatenate([state, action], axis=1)
    h1 = jnp.maximum(x @ w1 + b1, 0.0)
    h2 = jnp.maximum(h1 @ w2 + b2, 0.0)
    return h2 @ w3 + b3


if __name__ == "__main__":
    key = jax.random.PRNGKey(0)
    k_s, k_a, k_p, k_s2, k_a2 = jax.random.split(key, 5)

    state_dim, action_dim = 8, 4
    params = init_params(k_p, state_dim, action_dim)
    prepared = prepare_params(params)

    # Small batch: single 8-row tile, grid=(1,).
    batch = 8
    state = jax.random.normal(k_s, (batch, state_dim), jnp.float32)
    action = jax.random.normal(k_a, (batch, action_dim), jnp.float32)
    q = jax.block_until_ready(softq_forward_jit(state, action, prepared))
    q_ref = softq_reference(state, action, params)
    assert q.shape == (batch, 1)
    assert jnp.allclose(q, q_ref, atol=2e-2, rtol=2e-2), "mismatch vs reference (small batch)"

    # Larger, awkward batch: exercises low-waste padding + 2-step "parallel" grid.
    batch2 = 1030
    state2 = jax.random.normal(k_s2, (batch2, state_dim), jnp.float32)
    action2 = jax.random.normal(k_a2, (batch2, action_dim), jnp.float32)
    q2 = jax.block_until_ready(softq_forward_jit(state2, action2, prepared))
    q2_ref = softq_reference(state2, action2, params)
    assert q2.shape == (batch2, 1)
    assert jnp.allclose(q2, q2_ref, atol=2e-2, rtol=2e-2), "mismatch vs reference (large batch)"

    print("KERNEL_OK")
</pallas_src>

<mosaic_0001>
module attributes {stable_mosaic.version = 11 : i64} {
  func.func @_softq_kernel(%arg0: i32, %arg1: memref<8x12xbf16, #tpu.memory_space<vmem>>, %arg2: memref<12x128xbf16, #tpu.memory_space<vmem>>, %arg3: memref<1x128xf32, #tpu.memory_space<vmem>>, %arg4: memref<128x128xbf16, #tpu.memory_space<vmem>>, %arg5: memref<1x128xf32, #tpu.memory_space<vmem>>, %arg6: memref<1x128xf32, #tpu.memory_space<vmem>>, %arg7: memref<1x1xf32, #tpu.memory_space<smem>>, %arg8: memref<1x1x8xf32, #tpu.memory_space<vmem>>) attributes {dimension_semantics = [#tpu.dimension_semantics<parallel>], iteration_bounds = array<i64: 1>, scalar_prefetch = 0 : i64, scratch_operands = 0 : i64, tpu.core_type = #tpu.core_type<tc>, window_params = [{transform_indices = @transform_0, window_bounds = array<i64: 8, 12>}, {pipeline_mode = #tpu.pipeline_mode<synchronous>, transform_indices = @transform_1, window_bounds = array<i64: 12, 128>}, {pipeline_mode = #tpu.pipeline_mode<synchronous>, transform_indices = @transform_2, window_bounds = array<i64: 1, 128>}, {pipeline_mode = #tpu.pipeline_mode<synchronous>, transform_indices = @transform_3, window_bounds = array<i64: 128, 128>}, {pipeline_mode = #tpu.pipeline_mode<synchronous>, transform_indices = @transform_4, window_bounds = array<i64: 1, 128>}, {pipeline_mode = #tpu.pipeline_mode<synchronous>, transform_indices = @transform_5, window_bounds = array<i64: 1, 128>}, {transform_indices = @transform_6, window_bounds = array<i64: 1, 1>}, {transform_indices = @transform_7, window_bounds = array<i64: 1, 1, 8>}]} {
    %c0 = arith.constant 0 : index
    %c0_0 = arith.constant 0 : index
    %0 = vector.load %arg1[%c0, %c0_0] : memref<8x12xbf16, #tpu.memory_space<vmem>>, vector<8x12xbf16>
    %c0_1 = arith.constant 0 : index
    %c0_2 = arith.constant 0 : index
    %1 = vector.load %arg2[%c0_1, %c0_2] : memref<12x128xbf16, #tpu.memory_space<vmem>>, vector<12x128xbf16>
    %cst = arith.constant dense<0.000000e+00> : vector<8x128xf32>
    %2 = tpu.matmul %0, %1, %cst {dimension_numbers = #tpu.dot_dimension_numbers<[1], [0], [0], [1], [0, 0, 1, 1], [], []>} : vector<8x12xbf16>, vector<12x128xbf16>, vector<8x128xf32> -> vector<8x128xf32>
    %c0_3 = arith.constant 0 : index
    %c0_4 = arith.constant 0 : index
    %3 = vector.load %arg3[%c0_3, %c0_4] : memref<1x128xf32, #tpu.memory_space<vmem>>, vector<1x128xf32>
    %4 = vector.broadcast %3 : vector<1x128xf32> to vector<8x128xf32>
    %5 = arith.addf %2, %4 : vector<8x128xf32>
    %cst_5 = arith.constant 0.000000e+00 : f32
    %6 = vector.broadcast %cst_5 : f32 to vector<8x128xf32>
    %7 = arith.maximumf %5, %6 : vector<8x128xf32>
    %8 = arith.truncf %7 : vector<8x128xf32> to vector<8x128xbf16>
    %c0_6 = arith.constant 0 : index
    %c0_7 = arith.constant 0 : index
    %9 = vector.load %arg4[%c0_6, %c0_7] : memref<128x128xbf16, #tpu.memory_space<vmem>>, vector<128x128xbf16>
    %cst_8 = arith.constant dense<0.000000e+00> : vector<8x128xf32>
    %10 = tpu.matmul %8, %9, %cst_8 {dimension_numbers = #tpu.dot_dimension_numbers<[1], [0], [0], [1], [0, 0, 1, 1], [], []>} : vector<8x128xbf16>, vector<128x128xbf16>, vector<8x128xf32> -> vector<8x128xf32>
    %c0_9 = arith.constant 0 : index
    %c0_10 = arith.constant 0 : index
    %11 = vector.load %arg5[%c0_9, %c0_10] : memref<1x128xf32, #tpu.memory_space<vmem>>, vector<1x128xf32>
    %12 = vector.broadcast %11 : vector<1x128xf32> to vector<8x128xf32>
    %13 = arith.addf %10, %12 : vector<8x128xf32>
    %cst_11 = arith.constant 0.000000e+00 : f32
    %14 = vector.broadcast %cst_11 : f32 to vector<8x128xf32>
    %15 = arith.maximumf %13, %14 : vector<8x128xf32>
    %c0_12 = arith.constant 0 : index
    %c0_13 = arith.constant 0 : index
    %16 = vector.load %arg6[%c0_12, %c0_13] : memref<1x128xf32, #tpu.memory_space<vmem>>, vector<1x128xf32>
    %cst_14 = arith.constant dense<0.000000e+00> : vector<1x8xf32>
    %17 = tpu.matmul %16, %15, %cst_14 {dimension_numbers = #tpu.dot_dimension_numbers<[1], [1], [0], [0], [0, 0, 1, 0], [], []>} : vector<1x128xf32>, vector<8x128xf32>, vector<1x8xf32> -> vector<1x8xf32>
    %c0_15 = arith.constant 0 : index
    %c0_16 = arith.constant 0 : index
    %18 = memref.load %arg7[%c0_15, %c0_16] : memref<1x1xf32, #tpu.memory_space<smem>>
    %19 = vector.broadcast %18 : f32 to vector<1x8xf32>
    %20 = arith.addf %17, %19 : vector<1x8xf32>
    %21 = vector.shape_cast %20 : vector<1x8xf32> to vector<1x1x8xf32>
    %c0_17 = arith.constant 0 : index
    %c0_18 = arith.constant 0 : index
    %c0_19 = arith.constant 0 : index
    %22 = vector.load %arg8[%c0_17, %c0_18, %c0_19] : memref<1x1x8xf32, #tpu.memory_space<vmem>>, vector<1x1x8xf32>
    tpu.vector_store %arg8[%c0_17, %c0_18, %c0_19], %21 {strides = array<i32>} : memref<1x1x8xf32, #tpu.memory_space<vmem>>, vector<1x1x8xf32>,
    return
  }
  func.func @transform_0(%arg0: i32) -> (i32, i32) {
    %c0_i32 = arith.constant 0 : i32
    %c0_i32_0 = arith.constant 0 : i32
    return %arg0, %c0_i32 : i32, i32
  }
  func.func @transform_1(%arg0: i32) -> (i32, i32) {
    %c0_i32 = arith.constant 0 : i32
    %c0_i32_0 = arith.constant 0 : i32
    %c0_i32_1 = arith.constant 0 : i32
    return %c0_i32, %c0_i32_0 : i32, i32
  }
  func.func @transform_2(%arg0: i32) -> (i32, i32) {
    %c0_i32 = arith.constant 0 : i32
    %c0_i32_0 = arith.constant 0 : i32
    %c0_i32_1 = arith.constant 0 : i32
    return %c0_i32, %c0_i32_0 : i32, i32
  }
  func.func @transform_3(%arg0: i32) -> (i32, i32) {
    %c0_i32 = arith.constant 0 : i32
    %c0_i32_0 = arith.constant 0 : i32
    %c0_i32_1 = arith.constant 0 : i32
    return %c0_i32, %c0_i32_0 : i32, i32
  }
  func.func @transform_4(%arg0: i32) -> (i32, i32) {
    %c0_i32 = arith.constant 0 : i32
    %c0_i32_0 = arith.constant 0 : i32
    %c0_i32_1 = arith.constant 0 : i32
    return %c0_i32, %c0_i32_0 : i32, i32
  }
  func.func @transform_5(%arg0: i32) -> (i32, i32) {
    %c0_i32 = arith.constant 0 : i32
    %c0_i32_0 = arith.constant 0 : i32
    %c0_i32_1 = arith.constant 0 : i32
    return %c0_i32, %c0_i32_0 : i32, i32
  }
  func.func @transform_6(%arg0: i32) -> (i32, i32) {
    %c0_i32 = arith.constant 0 : i32
    %c0_i32_0 = arith.constant 0 : i32
    %c0_i32_1 = arith.constant 0 : i32
    return %c0_i32, %c0_i32_0 : i32, i32
  }
  func.func @transform_7(%arg0: i32) -> (i32, i32, i32) {
    %c0_i32 = arith.constant 0 : i32
    %c0_i32_0 = arith.constant 0 : i32
    %c0_i32_1 = arith.constant 0 : i32
    return %arg0, %c0_i32, %c0_i32_0 : i32, i32, i32
  }
}

</mosaic_0001>

<llo_original>
// kernel: softq_forward.1
$region0: #{softq_forward.1}
  #allocation0 [shape = 'u32[]', space=smem, size = 0x4, offset = 0x4, fixed_abs, tag = 'smem constant byte address 0x4 - core index']
  #allocation1 [shape = 'u32[144,128]{1,0:T(1,128)}', space=vmem, size = 0x12000, scoped, tag = 'internal scratch']
  #allocation2 [shape = 'f32[1,1]{1,0:T(1,128)S(6)}', space=smem, size = 0x200, scoped, tag = 'scoped memory for softq_forward.1']
  %s0 = inlined_call_operand.vmem [shape: bf16[8,12], index: 0, kind: input, shape index: {}]
  %s1 = inlined_call_operand.vmem [shape: bf16[12,128], index: 1, kind: input, shape index: {}]
  %s2 = inlined_call_operand.vmem [shape: f32[1,128], index: 2, kind: input, shape index: {}]
  %s3 = inlined_call_operand.hbm [shape: bf16[128,128], index: 3, kind: input, shape index: {}]
  %s4 = inlined_call_operand.vmem [shape: f32[1,128], index: 4, kind: input, shape index: {}]
  %s5 = inlined_call_operand.vmem [shape: f32[1,128], index: 5, kind: input, shape index: {}]
  %s6 = inlined_call_operand.<no memory space> [shape: f32[1,1], index: 6, kind: input, shape index: {}]
  %s7 = inlined_call_operand.hbm [shape: f32[1,1,8], index: 7, kind: output, shape index: {}]
  %s8 = sld [smem:[#allocation0]]
  $region42: #{softq_forward.1} parent=0
    _
  %s10 = ssub.s32 1, %s8
  %s11 = scalar_select 0, %s10, %s8
  %12 = sst [smem:[#allocation2]] %s6
  $region1: #{softq_forward.1} parent=0
    #allocation3 [shape = 'u8[32768]{0}', space=vmem, size = 0x8000, scoped, tag = 'input window, operand 3, single buffered']
    #allocation4 [shape = 's32[1]{0}', space=sflag, size = 0x4, scoped, tag = 'scoped memory for softq_forward.1']
    #allocation5 [shape = 's32[1]{0}', space=sflag, size = 0x4, scoped, tag = 'scoped memory for softq_forward.1']
    #allocation6 [shape = 'u8[512]{0}', space=vmem, size = 0x400, scoped, tag = 'output window, operand 0, single buffered']
    %13 = vsyncpa [#allocation4], 0
    %14 = vsyncpa [#allocation5], 0
    // Predicated region
    $region2: #{softq_forward.1} parent=1 // pred_check
      _
    $region3: #{softq_forward.1} parent=1 // pred_check_branch
      %16 = sbr.rel (0) target = $region5
    $region4: #{softq_forward.1} parent=1 // pred_region
      _
    $region5: #{softq_forward.1} parent=1 // pred_fallthru
      _
    // Predicated region
    $region6: #{softq_forward.1} parent=1 // pred_check
      _
    $region7: #{softq_forward.1} parent=1 // pred_check_branch
      %18 = sbr.rel (0) target = $region9
    $region8: #{softq_forward.1} parent=1 // pred_region
      _
    $region9: #{softq_forward.1} parent=1 // pred_fallthru
      _
    // Predicated region
    $region10: #{softq_forward.1} parent=1 // pred_check
      _
    $region11: #{softq_forward.1} parent=1 // pred_check_branch
      %20 = sbr.rel (0) target = $region13
    $region12: #{softq_forward.1} parent=1 // pred_region
      _
    $region13: #{softq_forward.1} parent=1 // pred_fallthru
      _
    // Predicated region
    $region14: #{softq_forward.1} parent=1 // pred_check
      _
    $region15: #{softq_forward.1} parent=1 // pred_check_branch
      %22 = sbr.rel (0) target = $region17
    $region16: #{softq_forward.1} parent=1 // pred_region
      %s24 = ssub.s32 1024, 1024
      %25 = vsyncadd [#allocation4], %s24
      %s26 = sshll.u32 [#allocation3], 4
      %s27 = int_to_ptr.vmem [resolvable:$true] %s26
      %32 = dma.hbm_to_vmem [thread:$0]  %s3, 1024, %s27, [#allocation4], 64, 64, 4
    $region17: #{softq_forward.1} parent=1 // pred_fallthru
      _
    // Predicated region
    $region18: #{softq_forward.1} parent=1 // pred_check
      _
    $region19: #{softq_forward.1} parent=1 // pred_check_branch
      %34 = sbr.rel (0) target = $region21
    $region20: #{softq_forward.1} parent=1 // pred_region
      _
    $region21: #{softq_forward.1} parent=1 // pred_fallthru
      _
    // Predicated region
    $region22: #{softq_forward.1} parent=1 // pred_check
      _
    $region23: #{softq_forward.1} parent=1 // pred_check_branch
      %36 = sbr.rel (0) target = $region25
    $region24: #{softq_forward.1} parent=1 // pred_region
      _
    $region25: #{softq_forward.1} parent=1 // pred_fallthru
      _
    // Predicated region
    $region26: #{softq_forward.1} parent=1 // pred_check
      _
    $region27: #{softq_forward.1} parent=1 // pred_check_branch
      %38 = sbr.rel (0) target = $region29
    $region28: #{softq_forward.1} parent=1 // pred_region
      _
    $region29: #{softq_forward.1} parent=1 // pred_fallthru
      _
    // Predicated region
    $region30: #{softq_forward.1} parent=1 // pred_check
      _
    $region31: #{softq_forward.1} parent=1 // pred_check_branch
      %40 = sbr.rel (0) target = $region33
    $region32: #{softq_forward.1} parent=1 // pred_region
      %41 = dma.done [#allocation4], 1024
    $region33: #{softq_forward.1} parent=1 // pred_fallthru
      _
    %v43 = vld [vmem:[%s0] sm:$0xf]
    %v44 = vld [vmem:[%s1] sm:$0xf]
    %v45 = vld [vmem:[%s1 + $0x4] sm:$0x3]
    %v46 = vld [vmem:[%s2] sm:$0x1]
    %v48 = vlaneseq
    %v49 = vshrl.u32 %v48, 7
    %v50 = vsub.s32 0, %v49
    %v51 = vrot.slane %v46, %v50
    %v55 = vunpack.c.l.b16 %v44
    %v56 = vunpack.c.l.b16 %v45
    %v57 = vpack.c.b16 %v56, %v55
    %vm58 = vcmask 97280
    %v60 = vsel %vm58, %v43, 0
    %vm62 = vcmask 1045504
    %v64 = vsel %vm62, %v57, 0
    %66 = vmatprep.subr.bf16.mxu0 0
    %67 = vmatpush1.bf16.msra.mxu0 %v64
    %68 = vmatprep.subr.bf16.mxu0 0
    %69 = vmatpush1.bf16.msra.mxu0 0
    %70 = vmatprep.subr.bf16.mxu0 0
    %71 = vmatpush1.bf16.msra.mxu0 0
    %72 = vmatprep.subr.bf16.mxu0 0
    %73 = vmatpush1.bf16.msra.mxu0 0
    %74 = vmatprep.subr.bf16.mxu0 0
    %75 = vmatpush1.bf16.msra.mxu0 0
    %76 = vmatprep.subr.bf16.mxu0 0
    %77 = vmatpush1.bf16.msra.mxu0 0
    %78 = vmatprep.subr.bf16.mxu0 0
    %79 = vmatpush1.bf16.msra.mxu0 0
    %80 = vmatprep.subr.bf16.mxu0 0
    %81 = vmatpush1.bf16.msra.mxu0 0
    %82 = vmatprep.subr.bf16.mxu0 0
    %83 = vmatpush1.bf16.msra.mxu0 0
    %84 = vmatprep.subr.bf16.mxu0 0
    %85 = vmatpush1.bf16.msra.mxu0 0
    %86 = vmatprep.subr.bf16.mxu0 0
    %87 = vmatpush1.bf16.msra.mxu0 0
    %88 = vmatprep.subr.bf16.mxu0 0
    %89 = vmatpush1.bf16.msra.mxu0 0
    %90 = vmatprep.subr.bf16.mxu0 0
    %91 = vmatpush1.bf16.msra.mxu0 0
    %92 = vmatprep.subr.bf16.mxu0 0
    %93 = vmatpush1.bf16.msra.mxu0 0
    %94 = vmatprep.subr.bf16.mxu0 0
    %95 = vmatpush1.bf16.msra.mxu0 0
    %96 = vmatprep.subr.bf16.mxu0 0
    %97 = vmatpush1.bf16.msra.mxu0 0
    %98 = vmatprep.mubr.bf16.mxu0 0
    %99 = vmatmul.mubr.bf16.gmra.mrb[0].mxu0 %v60
    %v100 = vpop.f32.mrb[0].mxu0
    %v101 = vadd.f32 %v51, %v100
    %v102 = vpop.f32.mrb[0].mxu0
    %v103 = vpop.f32.mrb[0].mxu0
    %v104 = vpop.f32.mrb[0].mxu0
    %105 = vdwg.mxu0
    %v106 = vmax.f32 %v101, 0.0
    %v107 = vpack.c.bf16 %v106, %v106
    %v108 = vld [vmem:[#allocation3] sm:$0xf]
    %v109 = vld [vmem:[#allocation3 + $0x4] sm:$0xf]
    %v110 = vld [vmem:[#allocation3 + $0x8] sm:$0xf]
    %v111 = vld [vmem:[#allocation3 + $0xc] sm:$0xf]
    %v112 = vld [vmem:[#allocation3 + $0x10] sm:$0xf]
    %v113 = vld [vmem:[#allocation3 + $0x14] sm:$0xf]
    %v114 = vld [vmem:[#allocation3 + $0x18] sm:$0xf]
    %v115 = vld [vmem:[#allocation3 + $0x1c] sm:$0xf]
    %v116 = vld [vmem:[#allocation3 + $0x20] sm:$0xf]
    %v117 = vld [vmem:[#allocation3 + $0x24] sm:$0xf]
    %v118 = vld [vmem:[#allocation3 + $0x28] sm:$0xf]
    %v119 = vld [vmem:[#allocation3 + $0x2c] sm:$0xf]
    %v120 = vld [vmem:[#allocation3 + $0x30] sm:$0xf]
    %v121 = vld [vmem:[#allocation3 + $0x34] sm:$0xf]
    %v122 = vld [vmem:[#allocation3 + $0x38] sm:$0xf]
    %v123 = vld [vmem:[#allocation3 + $0x3c] sm:$0xf]
    %v124 = vld [vmem:[%s4] sm:$0x1]
    %v126 = vlaneseq
    %v127 = vshrl.u32 %v126, 7
    %v128 = vsub.s32 0, %v127
    %v129 = vrot.slane %v124, %v128
    %v147 = vunpack.c.l.b16 %v108
    %v148 = vunpack.c.l.b16 %v109
    %v149 = vunpack.c.l.b16 %v110
    %v150 = vunpack.c.l.b16 %v111
    %v151 = vunpack.c.l.b16 %v112
    %v152 = vunpack.c.l.b16 %v113
    %v153 = vunpack.c.l.b16 %v114
    %v154 = vunpack.c.l.b16 %v115
    %v155 = vunpack.c.l.b16 %v116
    %v156 = vunpack.c.l.b16 %v117
    %v157 = vunpack.c.l.b16 %v118
    %v158 = vunpack.c.l.b16 %v119
    %v159 = vunpack.c.l.b16 %v120
    %v160 = vunpack.c.l.b16 %v121
    %v161 = vunpack.c.l.b16 %v122
    %v162 = vunpack.c.l.b16 %v123
    %v163 = vpack.c.b16 %v148, %v147
    %v164 = vpack.c.b16 %v150, %v149
    %v165 = vpack.c.b16 %v152, %v151
    %v166 = vpack.c.b16 %v154, %v153
    %v167 = vpack.c.b16 %v156, %v155
    %v168 = vpack.c.b16 %v158, %v157
    %v169 = vpack.c.b16 %v160, %v159
    %v170 = vpack.c.b16 %v162, %v161
    %179 = vmatprep.subr.bf16.mxu0 0
    %180 = vmatpush1.bf16.msra.mxu0 %v163
    %181 = vmatprep.subr.bf16.mxu0 0
    %182 = vmatpush1.bf16.msra.mxu0 %v164
    %183 = vmatprep.subr.bf16.mxu0 0
    %184 = vmatpush1.bf16.msra.mxu0 %v165
    %185 = vmatprep.subr.bf16.mxu0 0
    %186 = vmatpush1.bf16.msra.mxu0 %v166
    %187 = vmatprep.subr.bf16.mxu0 0
    %188 = vmatpush1.bf16.msra.mxu0 %v167
    %189 = vmatprep.subr.bf16.mxu0 0
    %190 = vmatpush1.bf16.msra.mxu0 %v168
    %191 = vmatprep.subr.bf16.mxu0 0
    %192 = vmatpush1.bf16.msra.mxu0 %v169
    %193 = vmatprep.subr.bf16.mxu0 0
    %194 = vmatpush1.bf16.msra.mxu0 %v170
    %195 = vmatprep.subr.bf16.mxu0 0
    %196 = vmatpush1.bf16.msra.mxu0 0
    %197 = vmatprep.subr.bf16.mxu0 0
    %198 = vmatpush1.bf16.msra.mxu0 0
    %199 = vmatprep.subr.bf16.mxu0 0
    %200 = vmatpush1.bf16.msra.mxu0 0
    %201 = vmatprep.subr.bf16.mxu0 0
    %202 = vmatpush1.bf16.msra.mxu0 0
    %203 = vmatprep.subr.bf16.mxu0 0
    %204 = vmatpush1.bf16.msra.mxu0 0
    %205 = vmatprep.subr.bf16.mxu0 0
    %206 = vmatpush1.bf16.msra.mxu0 0
    %207 = vmatprep.subr.bf16.mxu0 0
    %208 = vmatpush1.bf16.msra.mxu0 0
    %209 = vmatprep.subr.bf16.mxu0 0
    %210 = vmatpush1.bf16.msra.mxu0 0
    %211 = vmatprep.mubr.bf16.mxu0 0
    %212 = vmatmul.mubr.bf16.gmra.mrb[0].mxu0 %v107
    %v213 = vpop.f32.mrb[0].mxu0
    %v214 = vadd.f32 %v129, %v213
    %v215 = vpop.f32.mrb[0].mxu0
    %v216 = vpop.f32.mrb[0].mxu0
    %v217 = vpop.f32.mrb[0].mxu0
    %218 = vdwg.mxu0
    %v219 = vmax.f32 %v214, 0.0
    %v220 = vld [vmem:[%s5] sm:$0x1]
    %s221 = sld [smem:[#allocation2]]
    %v222 = vstv %s221
    %223 = vmatprep.subr.mxu0 0.0
    %224 = vmatpush1.xpose.msra.mxu0 %v219
    %225 = vmatprep.subr.mxu0 0.0
    %226 = vmatpush1.xpose.msra.mxu0 0.0
    %227 = vmatprep.subr.mxu0 0.0
    %228 = vmatpush1.xpose.msra.mxu0 0.0
    %229 = vmatprep.subr.mxu0 0.0
    %230 = vmatpush1.xpose.msra.mxu0 0.0
    %231 = vmatprep.subr.mxu0 0.0
    %232 = vmatpush1.xpose.msra.mxu0 0.0
    %233 = vmatprep.subr.mxu0 0.0
    %234 = vmatpush1.xpose.msra.mxu0 0.0
    %235 = vmatprep.subr.mxu0 0.0
    %236 = vmatpush1.xpose.msra.mxu0 0.0
    %237 = vmatprep.subr.mxu0 0.0
    %238 = vmatpush1.xpose.msra.mxu0 0.0
    %239 = vmatprep.subr.mxu0 0.0
    %240 = vmatpush1.xpose.msra.mxu0 0.0
    %241 = vmatprep.subr.mxu0 0.0
    %242 = vmatpush1.xpose.msra.mxu0 0.0
    %243 = vmatprep.subr.mxu0 0.0
    %244 = vmatpush1.xpose.msra.mxu0 0.0
    %245 = vmatprep.subr.mxu0 0.0
    %246 = vmatpush1.xpose.msra.mxu0 0.0
    %247 = vmatprep.subr.mxu0 0.0
    %248 = vmatpush1.xpose.msra.mxu0 0.0
    %249 = vmatprep.subr.mxu0 0.0
    %250 = vmatpush1.xpose.msra.mxu0 0.0
    %251 = vmatprep.subr.mxu0 0.0
    %252 = vmatpush1.xpose.msra.mxu0 0.0
    %253 = vmatprep.subr.mxu0 0.0
    %254 = vmatpush1.xpose.msra.mxu0 0.0
    %255 = vmatprep.subr.mxu0 0.0
    %256 = vmatpush1.xpose.msra.mxu0 0.0
    %257 = vmatprep.subr.mxu0 0.0
    %258 = vmatpush1.xpose.msra.mxu0 0.0
    %259 = vmatprep.subr.mxu0 0.0
    %260 = vmatpush1.xpose.msra.mxu0 0.0
    %261 = vmatprep.subr.mxu0 0.0
    %262 = vmatpush1.xpose.msra.mxu0 0.0
    %263 = vmatprep.subr.mxu0 0.0
    %264 = vmatpush1.xpose.msra.mxu0 0.0
    %265 = vmatprep.subr.mxu0 0.0
    %266 = vmatpush1.xpose.msra.mxu0 0.0
    %267 = vmatprep.subr.mxu0 0.0
    %268 = vmatpush1.xpose.msra.mxu0 0.0
    %269 = vmatprep.subr.mxu0 0.0
    %270 = vmatpush1.xpose.msra.mxu0 0.0
    %271 = vmatprep.subr.mxu0 0.0
    %272 = vmatpush1.xpose.msra.mxu0 0.0
    %273 = vmatprep.subr.mxu0 0.0
    %274 = vmatpush1.xpose.msra.mxu0 0.0
    %275 = vmatprep.subr.mxu0 0.0
    %276 = vmatpush1.xpose.msra.mxu0 0.0
    %277 = vmatprep.subr.mxu0 0.0
    %278 = vmatpush1.xpose.msra.mxu0 0.0
    %279 = vmatprep.subr.mxu0 0.0
    %280 = vmatpush1.xpose.msra.mxu0 0.0
    %281 = vmatprep.subr.mxu0 0.0
    %282 = vmatpush1.xpose.msra.mxu0 0.0
    %283 = vmatprep.subr.mxu0 0.0
    %284 = vmatpush1.xpose.msra.mxu0 0.0
    %285 = vmatprep.subr.mxu0 0.0
    %286 = vmatpush1.xpose.msra.mxu0 0.0
    %287 = vmatprep.mubr.f32.mxu0 0.0
    %288 = vmatmul.mubr.f32.gmra.mrb[0].mxu0 %v220
    %v289 = vpop.f32.mrb[0].mxu0
    %v290 = vadd.f32 %v222, %v289
    %v291 = vpop.f32.mrb[0].mxu0
    %292 = vdwg.mxu0
    %vm293 = vcmask 57344
    %294 = vst.msk [vmem:[#allocation6] sm:$0x1] %vm293, %v290
    // Predicated region
    $region34: #{softq_forward.1} parent=1 // pred_check
      _
    $region35: #{softq_forward.1} parent=1 // pred_check_branch
      %296 = sbr.rel (0) target = $region37
    $region36: #{softq_forward.1} parent=1 // pred_region
      %s298 = ssub.s32 16, 16
      %299 = vsyncadd [#allocation5], %s298
      %s301 = sshll.u32 [#allocation6], 4
      %s302 = int_to_ptr.vmem [resolvable:$true] %s301
      %304 = dma.vmem_to_hbm [thread:$0]  %s302, 16, %s7, [#allocation5]
    $region37: #{softq_forward.1} parent=1 // pred_fallthru
      _
    // Predicated region
    $region38: #{softq_forward.1} parent=1 // pred_check
      _
    $region39: #{softq_forward.1} parent=1 // pred_check_branch
      %306 = sbr.rel (0) target = $region41
    $region40: #{softq_forward.1} parent=1 // pred_region
      %307 = dma.done [#allocation5], 16
    $region41: #{softq_forward.1} parent=1 // pred_fallthru
      _
    %308 = vsyncpa [#allocation4], 1
    %309 = vsyncpa [#allocation5], 1

</llo_original>
